<compile_context>
chip_gen: v6e
topology: v6e:2x2x1
jax: 0.10.0
libtpu: 0.0.40
codegen_flags: <defaults>
</compile_context>

<pallas_src>
import jax
import jax.numpy as jnp
from jax.experimental import pallas as pl
from jax.experimental.pallas import tpu as pltpu


def _round_up(x, m):
    return (x + m - 1) // m * m


def _tpu_defaults():
    """(row-tile, vmem_limit_bytes) per TPU generation, with a safe fallback."""
    kind = ""
    try:
        kind = jax.devices()[0].device_kind.lower()
    except Exception:
        pass
    if "v7" in kind or "tpu7" in kind:       # 256-wide MXU, only 64 MiB VMEM
        return 256, 48 * 1024 * 1024
    if "v6" in kind or "tpu6" in kind:       # 256-wide MXU, 128 MiB VMEM
        return 256, 96 * 1024 * 1024
    if "v5" in kind:                         # 128-wide MXU, 128 MiB VMEM
        return 128, 96 * 1024 * 1024
    return 128, 64 * 1024 * 1024


def fused_gnn_kernel(a_ref, p_ref, r_ref, wrel2_ref, wroot2_ref, b2_ref,
                     o_ref, h_ref):
    """Two-phase fused GraphConv x2 over row stripes of the dense adjacency.

    phase 0: h_i = A_i @ P + R_i          (P = X @ Wrel1, R = X @ Wroot1 + b1)
             cached as bf16 in the persistent VMEM scratch h.
    phase 1: out_i = (A_i @ h) @ Wrel2 + h_i @ Wroot2 + b2.
    """
    phase = pl.program_id(0)
    i = pl.program_id(1)
    tile = o_ref.shape[0]
    row0 = pl.multiple_of(i * tile, tile)

    # int8-stored adjacency stripe -> bf16 for the MXU (cheap VPU cast, hidden by DMA).
    a_bf = a_ref[...].astype(jnp.bfloat16)

    @pl.when(phase == 0)
    def _phase0():
        h = jnp.dot(a_bf, p_ref[...], preferred_element_type=jnp.float32) + r_ref[...]
        h_ref[pl.ds(row0, tile), :] = h.astype(jnp.bfloat16)

        # Output block index is parked on 0 during phase 0; keep its buffer defined.
        @pl.when(i == 0)
        def _():
            o_ref[...] = jnp.zeros_like(o_ref)

    @pl.when(phase == 1)
    def _phase1():
        agg2 = jnp.dot(a_bf, h_ref[...], preferred_element_type=jnp.float32)
        h_i = h_ref[pl.ds(row0, tile), :]
        out = (jnp.dot(agg2.astype(jnp.bfloat16), wrel2_ref[...],
                       preferred_element_type=jnp.float32)
               + jnp.dot(h_i, wroot2_ref[...], preferred_element_type=jnp.float32)
               + b2_ref[...])
        o_ref[...] = out


def fused_gnn_pallas(a_i8, p_bf, r_f32, wrel2, wroot2, b2, *, tile_n, vmem_limit):
    n_pad = a_i8.shape[0]
    hid_p = p_bf.shape[1]
    fout_p = wrel2.shape[1]
    r = n_pad // tile_n

    const = lambda p, i: (0, 0)
    return pl.pallas_call(
        fused_gnn_kernel,
        out_shape=jax.ShapeDtypeStruct((n_pad, fout_p), jnp.float32),
        grid_spec=pltpu.PrefetchScalarGridSpec(
            num_scalar_prefetch=0,
            grid=(2, r),                                             # (phase, row tile)
            in_specs=[
                # A row stripe, int8 in HBM, streamed in both phases.
                pl.BlockSpec((tile_n, n_pad), lambda p, i: (i, 0)),
                # P = X @ Wrel1 (bf16), whole array resident across the grid.
                pl.BlockSpec((n_pad, hid_p), const),
                # R = X @ Wroot1 + b1 (f32): row-tiled in phase 0, parked on block 0
                # during phase 1 so it is not re-streamed with the second A pass.
                pl.BlockSpec((tile_n, hid_p), lambda p, i: (i * (1 - p), 0)),
                pl.BlockSpec((hid_p, fout_p), const),                # W_rel2 (bf16)
                pl.BlockSpec((hid_p, fout_p), const),                # W_root2 (bf16)
                pl.BlockSpec((1, fout_p), const),                    # b_rel2 (f32)
            ],
            # Phase 0 parks the output on block 0 (no writebacks); phase 1 walks tiles.
            out_specs=pl.BlockSpec((tile_n, fout_p), lambda p, i: (i * p, 0)),
            scratch_shapes=[
                pltpu.VMEM((n_pad, hid_p), jnp.bfloat16),            # h (layer-1 output)
            ],
        ),
        compiler_params=pltpu.CompilerParams(
            # Both axes sequential: phase 1 consumes VMEM scratch produced by phase 0.
            # TODO(synk): single-buffer the constant-index operands (pl.Buffered(1)) and/or
            # split into two pallas_calls so row tiles can shard across v7x's 2 TensorCores.
            dimension_semantics=("arbitrary", "arbitrary"),
            vmem_limit_bytes=vmem_limit,
        ),
    )(a_i8, p_bf, r_f32, wrel2, wroot2, b2)


def build_dense_adjacency(edge_index, n_pad):
    """Dense int8 adjacency with A[dst, src] = edge multiplicity.

    For a static graph, call this once and reuse the result across forward calls.
    TODO(synk): for sparse graphs (E << N^2) use a CSR + scalar-prefetch gather
    formulation instead of densifying the adjacency.
    """
    src, dst = edge_index[0], edge_index[1]
    return jnp.zeros((n_pad, n_pad), jnp.int8).at[dst, src].add(1)


def _prepare_inputs(params, x, edge_index, tile_n):
    """Build int8 adjacency + layer-1 projections, padded to lane-friendly shapes."""
    n = x.shape[0]
    hidden = params["w_rel1"].shape[1]
    fout = params["w_rel2"].shape[1]
    n_pad = _round_up(n, tile_n)
    hid_p = _round_up(hidden, 128)
    fout_p = _round_up(fout, 128)

    a = build_dense_adjacency(edge_index, n_pad)

    # Layer-1 projections hoisted out of the kernel (one small f32 matmul pair in XLA).
    p_full = x @ params["w_rel1"]                       # X @ W_rel1
    r_full = x @ params["w_root1"] + params["b_rel1"]   # X @ W_root1 + b1

    def pad2(m, rows, cols):
        return jnp.pad(m, ((0, rows - m.shape[0]), (0, cols - m.shape[1])))

    return (
        a,                                                           # int8 adjacency
        pad2(p_full, n_pad, hid_p).astype(jnp.bfloat16),
        pad2(r_full, n_pad, hid_p).astype(jnp.float32),
        pad2(params["w_rel2"], hid_p, fout_p).astype(jnp.bfloat16),
        pad2(params["w_root2"], hid_p, fout_p).astype(jnp.bfloat16),
        pad2(params["b_rel2"], 1, fout_p).astype(jnp.float32),
    )


def gnn_forward(params, x, edge_index, batch, *, tile_n=None, vmem_limit=None):
    """Pallas forward matching GNN.forward: conv2(conv1(x, edge_index), edge_index)."""
    del batch  # unused by the reference forward
    n = x.shape[0]
    fout = params["w_rel2"].shape[1]
    t, v = _tpu_defaults()
    tile_n = tile_n or t
    vmem_limit = vmem_limit or v
    ops = _prepare_inputs(params, x, edge_index, tile_n)
    out = fused_gnn_pallas(*ops, tile_n=tile_n, vmem_limit=vmem_limit)
    return out[:n, :fout]


def init_params(key, in_dim=64, hidden=128, out_dim=1):
    ks = jax.random.split(key, 6)
    s1 = 1.0 / jnp.sqrt(in_dim)
    s2 = 1.0 / jnp.sqrt(hidden)
    return {
        # conv1: GraphConv(64, 128)
        "w_rel1": jax.random.uniform(ks[0], (in_dim, hidden), jnp.float32, -s1, s1),
        "w_root1": jax.random.uniform(ks[1], (in_dim, hidden), jnp.float32, -s1, s1),
        "b_rel1": jax.random.uniform(ks[2], (1, hidden), jnp.float32, -s1, s1),
        # conv2: GraphConv(128, 1)
        "w_rel2": jax.random.uniform(ks[3], (hidden, out_dim), jnp.float32, -s2, s2),
        "w_root2": jax.random.uniform(ks[4], (hidden, out_dim), jnp.float32, -s2, s2),
        "b_rel2": jax.random.uniform(ks[5], (1, out_dim), jnp.float32, -s2, s2),
    }


def _fused_math_ref(a_i8, p_bf, r_f32, wrel2, wroot2, b2):
    """Pure-JAX reference of the exact kernel math (same casts, f32 accumulation)."""
    a_bf = a_i8.astype(jnp.bfloat16)
    h = jnp.dot(a_bf, p_bf, preferred_element_type=jnp.float32) + r_f32
    h_bf = h.astype(jnp.bfloat16)
    agg2 = jnp.dot(a_bf, h_bf, preferred_element_type=jnp.float32)
    return (jnp.dot(agg2.astype(jnp.bfloat16), wrel2, preferred_element_type=jnp.float32)
            + jnp.dot(h_bf, wroot2, preferred_element_type=jnp.float32) + b2)


def gnn_forward_ref_f32(params, x, edge_index, batch):
    """Pure-f32 JAX reference with the original PyTorch-module semantics."""
    del batch
    n = x.shape[0]
    src, dst = edge_index[0], edge_index[1]
    a = jnp.zeros((n, n), jnp.float32).at[dst, src].add(1.0)
    h = a @ x @ params["w_rel1"] + params["b_rel1"] + x @ params["w_root1"]
    return a @ h @ params["w_rel2"] + params["b_rel2"] + h @ params["w_root2"]


if __name__ == "__main__":
    key = jax.random.PRNGKey(0)
    k_x, k_e, k_p = jax.random.split(key, 3)

    N, E, IN_DIM, HIDDEN, OUT_DIM = 16, 48, 64, 128, 1
    x = jax.random.normal(k_x, (N, IN_DIM), jnp.float32)
    edge_index = jax.random.randint(k_e, (2, E), 0, N, dtype=jnp.int32)
    batch = jnp.zeros((N,), jnp.int32)  # single graph (unused by forward)

    params = init_params(k_p, IN_DIM, HIDDEN, OUT_DIM)

    out = jax.jit(gnn_forward)(params, x, edge_index, batch)
    out = jax.block_until_ready(out)
    assert out.shape == (N, OUT_DIM)

    # Tight check: kernel vs identical-precision JAX math (same casts, f32 accumulate).
    tile_n, _ = _tpu_defaults()
    ops = _prepare_inputs(params, x, edge_index, tile_n)
    ref_matched = _fused_math_ref(*ops)[:N, :OUT_DIM]
    assert jnp.allclose(out, ref_matched, atol=2e-3, rtol=2e-3), (
        float(jnp.max(jnp.abs(out - ref_matched))))

    # Sanity check vs the pure-f32 reference (budget for bf16 rounding of P/h/agg2).
    ref_f32 = gnn_forward_ref_f32(params, x, edge_index, batch)
    assert jnp.allclose(out, ref_f32, atol=1e-1, rtol=1e-1), (
        float(jnp.max(jnp.abs(out - ref_f32))))

    print("KERNEL_OK")
</pallas_src>

<mosaic_0001>
module attributes {stable_mosaic.version = 11 : i64} {
  func.func @fused_gnn_kernel(%arg0: i32, %arg1: i32, %arg2: memref<128x128xi8, #tpu.memory_space<vmem>>, %arg3: memref<128x128xbf16, #tpu.memory_space<vmem>>, %arg4: memref<128x128xf32, #tpu.memory_space<vmem>>, %arg5: memref<128x128xbf16, #tpu.memory_space<vmem>>, %arg6: memref<128x128xbf16, #tpu.memory_space<vmem>>, %arg7: memref<1x128xf32, #tpu.memory_space<vmem>>, %arg8: memref<128x128xf32, #tpu.memory_space<vmem>>, %arg9: memref<128x128xbf16, #tpu.memory_space<vmem>>) attributes {dimension_semantics = [#tpu.dimension_semantics<arbitrary>, #tpu.dimension_semantics<arbitrary>], iteration_bounds = array<i64: 2, 1>, scalar_prefetch = 0 : i64, scratch_operands = 1 : i64, tpu.core_type = #tpu.core_type<tc>, window_params = [{transform_indices = @transform_0, window_bounds = array<i64: 128, 128>}, {pipeline_mode = #tpu.pipeline_mode<synchronous>, transform_indices = @transform_1, window_bounds = array<i64: 128, 128>}, {transform_indices = @transform_2, window_bounds = array<i64: 128, 128>}, {pipeline_mode = #tpu.pipeline_mode<synchronous>, transform_indices = @transform_3, window_bounds = array<i64: 128, 128>}, {pipeline_mode = #tpu.pipeline_mode<synchronous>, transform_indices = @transform_4, window_bounds = array<i64: 128, 128>}, {pipeline_mode = #tpu.pipeline_mode<synchronous>, transform_indices = @transform_5, window_bounds = array<i64: 1, 128>}, {transform_indices = @transform_6, window_bounds = array<i64: 128, 128>}]} {
    %c128_i32 = arith.constant 128 : i32
    %0 = arith.muli %arg1, %c128_i32 : i32
    %1 = tpu.assume_multiple %0, 128 : i32
    %c0 = arith.constant 0 : index
    %c0_0 = arith.constant 0 : index
    %2 = vector.load %arg2[%c0, %c0_0] : memref<128x128xi8, #tpu.memory_space<vmem>>, vector<128x128xi8>
    %3 = arith.sitofp %2 : vector<128x128xi8> to vector<128x128xbf16>
    %c0_i32 = arith.constant 0 : i32
    %4 = arith.cmpi eq, %arg0, %c0_i32 : i32
    %5 = arith.extui %4 : i1 to i32
    %c0_i32_1 = arith.constant 0 : i32
    %6 = arith.cmpi ne, %5, %c0_i32_1 : i32
    scf.if %6 {
      %c0_3 = arith.constant 0 : index
      %c0_4 = arith.constant 0 : index
      %10 = vector.load %arg3[%c0_3, %c0_4] : memref<128x128xbf16, #tpu.memory_space<vmem>>, vector<128x128xbf16>
      %cst = arith.constant dense<0.000000e+00> : vector<128x128xf32>
      %11 = tpu.matmul %3, %10, %cst {dimension_numbers = #tpu.dot_dimension_numbers<[1], [0], [0], [1], [0, 0, 1, 1], [], []>} : vector<128x128xbf16>, vector<128x128xbf16>, vector<128x128xf32> -> vector<128x128xf32>
      %c0_5 = arith.constant 0 : index
      %c0_6 = arith.constant 0 : index
      %12 = vector.load %arg4[%c0_5, %c0_6] : memref<128x128xf32, #tpu.memory_space<vmem>>, vector<128x128xf32>
      %13 = arith.addf %11, %12 : vector<128x128xf32>
      %14 = arith.truncf %13 : vector<128x128xf32> to vector<128x128xbf16>
      %15 = arith.index_cast %1 : i32 to index
      %c0_7 = arith.constant 0 : index
      %16 = vector.load %arg9[%15, %c0_7] : memref<128x128xbf16, #tpu.memory_space<vmem>>, vector<128x128xbf16>
      tpu.vector_store %arg9[%15, %c0_7], %14 {strides = array<i32>} : memref<128x128xbf16, #tpu.memory_space<vmem>>, vector<128x128xbf16>,
      %c0_i32_8 = arith.constant 0 : i32
      %17 = arith.cmpi eq, %arg1, %c0_i32_8 : i32
      %18 = arith.extui %17 : i1 to i32
      %c0_i32_9 = arith.constant 0 : i32
      %19 = arith.cmpi ne, %18, %c0_i32_9 : i32
      scf.if %19 {
        %cst_10 = arith.constant 0.000000e+00 : f32
        %20 = vector.broadcast %cst_10 : f32 to vector<128x128xf32>
        %c0_11 = arith.constant 0 : index
        %c0_12 = arith.constant 0 : index
        %21 = vector.load %arg8[%c0_11, %c0_12] : memref<128x128xf32, #tpu.memory_space<vmem>>, vector<128x128xf32>
        tpu.vector_store %arg8[%c0_11, %c0_12], %20 {strides = array<i32>} : memref<128x128xf32, #tpu.memory_space<vmem>>, vector<128x128xf32>,
      } else {
      }
    } else {
    }
    %c1_i32 = arith.constant 1 : i32
    %7 = arith.cmpi eq, %arg0, %c1_i32 : i32
    %8 = arith.extui %7 : i1 to i32
    %c0_i32_2 = arith.constant 0 : i32
    %9 = arith.cmpi ne, %8, %c0_i32_2 : i32
    scf.if %9 {
      %c0_3 = arith.constant 0 : index
      %c0_4 = arith.constant 0 : index
      %10 = vector.load %arg9[%c0_3, %c0_4] : memref<128x128xbf16, #tpu.memory_space<vmem>>, vector<128x128xbf16>
      %cst = arith.constant dense<0.000000e+00> : vector<128x128xf32>
      %11 = tpu.matmul %3, %10, %cst {dimension_numbers = #tpu.dot_dimension_numbers<[1], [0], [0], [1], [0, 0, 1, 1], [], []>} : vector<128x128xbf16>, vector<128x128xbf16>, vector<128x128xf32> -> vector<128x128xf32>
      %12 = arith.index_cast %1 : i32 to index
      %c0_5 = arith.constant 0 : index
      %13 = vector.load %arg9[%12, %c0_5] : memref<128x128xbf16, #tpu.memory_space<vmem>>, vector<128x128xbf16>
      %14 = arith.truncf %11 : vector<128x128xf32> to vector<128x128xbf16>
      %c0_6 = arith.constant 0 : index
      %c0_7 = arith.constant 0 : index
      %15 = vector.load %arg5[%c0_6, %c0_7] : memref<128x128xbf16, #tpu.memory_space<vmem>>, vector<128x128xbf16>
      %cst_8 = arith.constant dense<0.000000e+00> : vector<128x128xf32>
      %16 = tpu.matmul %14, %15, %cst_8 {dimension_numbers = #tpu.dot_dimension_numbers<[1], [0], [0], [1], [0, 0, 1, 1], [], []>} : vector<128x128xbf16>, vector<128x128xbf16>, vector<128x128xf32> -> vector<128x128xf32>
      %c0_9 = arith.constant 0 : index
      %c0_10 = arith.constant 0 : index
      %17 = vector.load %arg6[%c0_9, %c0_10] : memref<128x128xbf16, #tpu.memory_space<vmem>>, vector<128x128xbf16>
      %cst_11 = arith.constant dense<0.000000e+00> : vector<128x128xf32>
      %18 = tpu.matmul %13, %17, %cst_11 {dimension_numbers = #tpu.dot_dimension_numbers<[1], [0], [0], [1], [0, 0, 1, 1], [], []>} : vector<128x128xbf16>, vector<128x128xbf16>, vector<128x128xf32> -> vector<128x128xf32>
      %19 = arith.addf %16, %18 : vector<128x128xf32>
      %c0_12 = arith.constant 0 : index
      %c0_13 = arith.constant 0 : index
      %20 = vector.load %arg7[%c0_12, %c0_13] : memref<1x128xf32, #tpu.memory_space<vmem>>, vector<1x128xf32>
      %21 = vector.broadcast %20 : vector<1x128xf32> to vector<128x128xf32>
      %22 = arith.addf %19, %21 : vector<128x128xf32>
      %c0_14 = arith.constant 0 : index
      %c0_15 = arith.constant 0 : index
      %23 = vector.load %arg8[%c0_14, %c0_15] : memref<128x128xf32, #tpu.memory_space<vmem>>, vector<128x128xf32>
      tpu.vector_store %arg8[%c0_14, %c0_15], %22 {strides = array<i32>} : memref<128x128xf32, #tpu.memory_space<vmem>>, vector<128x128xf32>,
    } else {
    }
    return
  }
  func.func @transform_0(%arg0: i32, %arg1: i32) -> (i32, i32) {
    %c0_i32 = arith.constant 0 : i32
    %c0_i32_0 = arith.constant 0 : i32
    return %arg1, %c0_i32 : i32, i32
  }
  func.func @transform_1(%arg0: i32, %arg1: i32) -> (i32, i32) {
    %c0_i32 = arith.constant 0 : i32
    %c0_i32_0 = arith.constant 0 : i32
    %c0_i32_1 = arith.constant 0 : i32
    return %c0_i32, %c0_i32_0 : i32, i32
  }
  func.func @transform_2(%arg0: i32, %arg1: i32) -> (i32, i32) {
    %c1_i32 = arith.constant 1 : i32
    %0 = arith.subi %c1_i32, %arg0 : i32
    %1 = arith.muli %arg1, %0 : i32
    %c0_i32 = arith.constant 0 : i32
    %c0_i32_0 = arith.constant 0 : i32
    return %1, %c0_i32 : i32, i32
  }
  func.func @transform_3(%arg0: i32, %arg1: i32) -> (i32, i32) {
    %c0_i32 = arith.constant 0 : i32
    %c0_i32_0 = arith.constant 0 : i32
    %c0_i32_1 = arith.constant 0 : i32
    return %c0_i32, %c0_i32_0 : i32, i32
  }
  func.func @transform_4(%arg0: i32, %arg1: i32) -> (i32, i32) {
    %c0_i32 = arith.constant 0 : i32
    %c0_i32_0 = arith.constant 0 : i32
    %c0_i32_1 = arith.constant 0 : i32
    return %c0_i32, %c0_i32_0 : i32, i32
  }
  func.func @transform_5(%arg0: i32, %arg1: i32) -> (i32, i32) {
    %c0_i32 = arith.constant 0 : i32
    %c0_i32_0 = arith.constant 0 : i32
    %c0_i32_1 = arith.constant 0 : i32
    return %c0_i32, %c0_i32_0 : i32, i32
  }
  func.func @transform_6(%arg0: i32, %arg1: i32) -> (i32, i32) {
    %0 = arith.muli %arg1, %arg0 : i32
    %c0_i32 = arith.constant 0 : i32
    %c0_i32_0 = arith.constant 0 : i32
    return %0, %c0_i32 : i32, i32
  }
}

</mosaic_0001>

<llo_original>
// kernel: gnn_forward.1
$region0: #{gnn_forward.1}
  #allocation0 [shape = 'u32[]', space=smem, size = 0x4, offset = 0x4, fixed_abs, tag = 'smem constant byte address 0x4 - core index']
  #allocation1 [shape = 'u32[144,128]{1,0:T(1,128)}', space=vmem, size = 0x12000, scoped, tag = 'internal scratch']
  #allocation2 [shape = 'bf16[128,128]{1,0:T(8,128)(2,1)}', space=vmem, size = 0x8000, scoped, tag = 'scratch operand']
  %s0 = inlined_call_operand.vmem [shape: s8[128,128], index: 0, kind: input, shape index: {}]
  %s1 = inlined_call_operand.vmem [shape: bf16[128,128], index: 1, kind: input, shape index: {}]
  %s2 = inlined_call_operand.vmem [shape: f32[128,128], index: 2, kind: input, shape index: {}]
  %s3 = inlined_call_operand.vmem [shape: bf16[128,128], index: 3, kind: input, shape index: {}]
  %s4 = inlined_call_operand.vmem [shape: bf16[128,128], index: 4, kind: input, shape index: {}]
  %s5 = inlined_call_operand.vmem [shape: f32[1,128], index: 5, kind: input, shape index: {}]
  %s6 = inlined_call_operand.vmem [shape: f32[128,128], index: 6, kind: output, shape index: {}]
  %s7 = sld [smem:[#allocation0]]
  $region69: #{gnn_forward.1} parent=0
    _
  %s9 = ssub.s32 1, %s7
  %s10 = scalar_select 0, %s9, %s7
  loop: start=0, step=1, limit=4
  $region2: #{gnn_forward.1} parent=0 // loop_pre_header
    _
  $region3: #{gnn_forward.1} parent=0 // loop_header
    %s12 = sphi 0, %s16
    %p13 = scmp.ge.s32.totalorder %s12, 4
    %s19 = sphi 0, %s31
    %s20 = sphi 0, %s27
    %s21 = sphi 0, %s19
    %s22 = sphi 0, %s20
    %s23 = sphi 0, %s21
    %s24 = sphi 0, %s22
    %s34 = sphi 0, %s36
    %s37 = sphi 0, %s34
    %s38 = sphi 0, %s37
    %s54 = sphi 0, %s38
    %s58 = sphi 0, %s58
    %s60 = sphi 0, %s58
    %s61 = sphi 0, %s60
    %s75 = sphi 0, %s61
    %s85 = sphi 0, %s87
    %s88 = sphi 0, %s85
    %s89 = sphi 0, %s88
    %s105 = sphi 0, %s89
    %s109 = sphi 0, %s109
    %s111 = sphi 0, %s109
    %s112 = sphi 0, %s111
    %s126 = sphi 0, %s112
    %s130 = sphi 0, %s130
    %s132 = sphi 0, %s130
    %s133 = sphi 0, %s132
    %s147 = sphi 0, %s133
    %s151 = sphi 0, %s151
    %s153 = sphi 0, %s151
    %s154 = sphi 0, %s153
    %s168 = sphi 0, %s154
    %s176 = sphi 0, %s178
    %s179 = sphi 0, %s176
    %s180 = sphi 0, %s179
    %s196 = sphi 0, %s180
  $region4: #{gnn_forward.1} parent=0 // loop_header_branch
    %15 = sbr.rel (%p13) target = $region8
  $region5: #{gnn_forward.1} parent=0 // loop_body
    %s17 = ssub.s32 %s12, 1
    %s18 = ssub.s32 %s12, 2
    %s25 = sadd.s32 1, %s20
    %p26 = scmp.ge.s32.totalorder %s25, 1
    %s27 = scalar_select %p26, 0, %s25
    %s28 = sadd.s32 1, %s19
    %s29 = scalar_select %p26, %s28, %s19
    %p30 = scmp.ge.s32.totalorder %s29, 2
    %s31 = scalar_select %p30, 0, %s29
    %s32 = ssub.s32 %s20, %s27
    %p33 = scmp.eq.s32.totalorder %s32, 0
    %s35 = sadd.s32 %s34, 1
    %s36 = scalar_select %p33, %s34, %s35
    %p39 = pneg %p33
    %p40 = scmp.eq.s32.totalorder %s12, 1
    %p41 = por %p39, %p40
    %p42 = scmp.ne.s32.totalorder %s34, %s37
    %p43 = scmp.eq.s32.totalorder %s12, 0
    %p44 = por %p42, %p43
    %p45 = scmp.ne.s32.totalorder %s34, %s37
    %p46 = scmp.eq.s32.totalorder %s17, 1
    %p47 = por %p45, %p46
    %p48 = scmp.ne.s32.totalorder %s37, %s38
    %p49 = scmp.eq.s32.totalorder %s17, 0
    %p50 = por %p48, %p49
    %p51 = scmp.ne.s32.totalorder %s37, %s38
    %p52 = scmp.eq.s32.totalorder %s18, 1
    %p53 = por %p51, %p52
    %p55 = scmp.ne.s32.totalorder %s38, %s54
    %p56 = scmp.eq.s32.totalorder %s18, 0
    %p57 = por %p55, %p56
    %s59 = sadd.s32 %s58, 1
    %p62 = scmp.eq.s32.totalorder %s12, 1
    %p63 = scmp.ne.s32.totalorder %s58, %s60
    %p64 = scmp.eq.s32.totalorder %s12, 0
    %p65 = por %p63, %p64
    %p66 = scmp.ne.s32.totalorder %s58, %s60
    %p67 = scmp.eq.s32.totalorder %s17, 1
    %p68 = por %p66, %p67
    %p69 = scmp.ne.s32.totalorder %s60, %s61
    %p70 = scmp.eq.s32.totalorder %s17, 0
    %p71 = por %p69, %p70
    %p72 = scmp.ne.s32.totalorder %s60, %s61
    %p73 = scmp.eq.s32.totalorder %s18, 1
    %p74 = por %p72, %p73
    %p76 = scmp.ne.s32.totalorder %s61, %s75
    %p77 = scmp.eq.s32.totalorder %s18, 0
    %p78 = por %p76, %p77
    %s79 = ssub.s32 1, %s19
    %s80 = smul.u32 %s20, %s79
    %s81 = ssub.s32 1, %s31
    %s82 = smul.u32 %s27, %s81
    %s83 = ssub.s32 %s80, %s82
    %p84 = scmp.eq.s32.totalorder %s83, 0
    %s86 = sadd.s32 %s85, 1
    %s87 = scalar_select %p84, %s85, %s86
    %p90 = pneg %p84
    %p91 = scmp.eq.s32.totalorder %s12, 1
    %p92 = por %p90, %p91
    %p93 = scmp.ne.s32.totalorder %s85, %s88
    %p94 = scmp.eq.s32.totalorder %s12, 0
    %p95 = por %p93, %p94
    %p96 = scmp.ne.s32.totalorder %s85, %s88
    %p97 = scmp.eq.s32.totalorder %s17, 1
    %p98 = por %p96, %p97
    %p99 = scmp.ne.s32.totalorder %s88, %s89
    %p100 = scmp.eq.s32.totalorder %s17, 0
    %p101 = por %p99, %p100
    %p102 = scmp.ne.s32.totalorder %s88, %s89
    %p103 = scmp.eq.s32.totalorder %s18, 1
    %p104 = por %p102, %p103
    %p106 = scmp.ne.s32.totalorder %s89, %s105
    %p107 = scmp.eq.s32.totalorder %s18, 0
    %p108 = por %p106, %p107
    %s110 = sadd.s32 %s109, 1
    %p113 = scmp.eq.s32.totalorder %s12, 1
    %p114 = scmp.ne.s32.totalorder %s109, %s111
    %p115 = scmp.eq.s32.totalorder %s12, 0
    %p116 = por %p114, %p115
    %p117 = scmp.ne.s32.totalorder %s109, %s111
    %p118 = scmp.eq.s32.totalorder %s17, 1
    %p119 = por %p117, %p118
    %p120 = scmp.ne.s32.totalorder %s111, %s112
    %p121 = scmp.eq.s32.totalorder %s17, 0
    %p122 = por %p120, %p121
    %p123 = scmp.ne.s32.totalorder %s111, %s112
    %p124 = scmp.eq.s32.totalorder %s18, 1
    %p125 = por %p123, %p124
    %p127 = scmp.ne.s32.totalorder %s112, %s126
    %p128 = scmp.eq.s32.totalorder %s18, 0
    %p129 = por %p127, %p128
    %s131 = sadd.s32 %s130, 1
    %p134 = scmp.eq.s32.totalorder %s12, 1
    %p135 = scmp.ne.s32.totalorder %s130, %s132
    %p136 = scmp.eq.s32.totalorder %s12, 0
    %p137 = por %p135, %p136
    %p138 = scmp.ne.s32.totalorder %s130, %s132
    %p139 = scmp.eq.s32.totalorder %s17, 1
    %p140 = por %p138, %p139
    %p141 = scmp.ne.s32.totalorder %s132, %s133
    %p142 = scmp.eq.s32.totalorder %s17, 0
    %p143 = por %p141, %p142
    %p144 = scmp.ne.s32.totalorder %s132, %s133
    %p145 = scmp.eq.s32.totalorder %s18, 1
    %p146 = por %p144, %p145
    %p148 = scmp.ne.s32.totalorder %s133, %s147
    %p149 = scmp.eq.s32.totalorder %s18, 0
    %p150 = por %p148, %p149
    %s152 = sadd.s32 %s151, 1
    %p155 = scmp.eq.s32.totalorder %s12, 1
    %p156 = scmp.ne.s32.totalorder %s151, %s153
    %p157 = scmp.eq.s32.totalorder %s12, 0
    %p158 = por %p156, %p157
    %p159 = scmp.ne.s32.totalorder %s151, %s153
    %p160 = scmp.eq.s32.totalorder %s17, 1
    %p161 = por %p159, %p160
    %p162 = scmp.ne.s32.totalorder %s153, %s154
    %p163 = scmp.eq.s32.totalorder %s17, 0
    %p164 = por %p162, %p163
    %p165 = scmp.ne.s32.totalorder %s153, %s154
    %p166 = scmp.eq.s32.totalorder %s18, 1
    %p167 = por %p165, %p166
    %p169 = scmp.ne.s32.totalorder %s154, %s168
    %p170 = scmp.eq.s32.totalorder %s18, 0
    %p171 = por %p169, %p170
    %s172 = smul.u32 %s20, %s19
    %s173 = smul.u32 %s27, %s31
    %s174 = ssub.s32 %s172, %s173
    %p175 = scmp.eq.s32.totalorder %s174, 0
    %s177 = sadd.s32 %s176, 1
    %s178 = scalar_select %p175, %s176, %s177
    %p181 = pneg %p175
    %p182 = scmp.eq.s32.totalorder %s12, 1
    %p183 = por %p181, %p182
    %p184 = scmp.ne.s32.totalorder %s176, %s179
    %p185 = scmp.eq.s32.totalorder %s12, 0
    %p186 = por %p184, %p185
    %p187 = scmp.ne.s32.totalorder %s176, %s179
    %p188 = scmp.eq.s32.totalorder %s17, 1
    %p189 = por %p187, %p188
    %p190 = scmp.ne.s32.totalorder %s179, %s180
    %p191 = scmp.eq.s32.totalorder %s17, 0
    %p192 = por %p190, %p191
    %p193 = scmp.ne.s32.totalorder %s179, %s180
    %p194 = scmp.eq.s32.totalorder %s18, 1
    %p195 = por %p193, %p194
    %p197 = scmp.ne.s32.totalorder %s180, %s196
    %p198 = scmp.eq.s32.totalorder %s18, 0
    %p199 = por %p197, %p198
    %p200 = scmp.le.s32.totalorder 1, %s12
    %p201 = scmp.lt.s32.totalorder %s12, 3
    %p202 = pnand %p200, %p201
    %p203 = pneg %p202
    // Predicated region
    $region9: #{gnn_forward.1} parent=5 // pred_check
      _
    $region10: #{gnn_forward.1} parent=5 // pred_check_branch
      %205 = sbr.rel (%p202) target = $region12
    $region11: #{gnn_forward.1} parent=5 // pred_region
      %s206 = ssub.s32 %s12, 1
      // Predicated region
      $region13: #{gnn_forward.1} parent=11 // pred_check
        %p207 = pneg %p50
      $region14: #{gnn_forward.1} parent=11 // pred_check_branch
        %209 = sbr.rel (%p207) target = $region16
      $region15: #{gnn_forward.1} parent=11 // pred_region
        %s210 = smul.u32 16, %s22
        %p211 = scmp.lt.s32.totalorder %s210, 15
        %s212 = scalar_select %p211, %s210, 15
        %s213 = smul.addr %s212, 2
        %s214 = scalar_lea.vmem %s0, %s213
        %s215 = smul.u32 16, %s22
      $region16: #{gnn_forward.1} parent=11 // pred_fallthru
        _
      // Predicated region
      $region17: #{gnn_forward.1} parent=11 // pred_check
        %p216 = pneg %p71
      $region18: #{gnn_forward.1} parent=11 // pred_check_branch
        %218 = sbr.rel (%p216) target = $region20
      $region19: #{gnn_forward.1} parent=11 // pred_region
        _
      $region20: #{gnn_forward.1} parent=11 // pred_fallthru
        _
      // Predicated region
      $region21: #{gnn_forward.1} parent=11 // pred_check
        %p219 = pneg %p122
      $region22: #{gnn_forward.1} parent=11 // pred_check_branch
        %221 = sbr.rel (%p219) target = $region24
      $region23: #{gnn_forward.1} parent=11 // pred_region
        _
      $region24: #{gnn_forward.1} parent=11 // pred_fallthru
        _
      // Predicated region
      $region25: #{gnn_forward.1} parent=11 // pred_check
        %p222 = pneg %p143
      $region26: #{gnn_forward.1} parent=11 // pred_check_branch
        %224 = sbr.rel (%p222) target = $region28
      $region27: #{gnn_forward.1} parent=11 // pred_region
        _
      $region28: #{gnn_forward.1} parent=11 // pred_fallthru
        _
      // Predicated region
      $region29: #{gnn_forward.1} parent=11 // pred_check
        %p225 = pneg %p164
      $region30: #{gnn_forward.1} parent=11 // pred_check_branch
        %227 = sbr.rel (%p225) target = $region32
      $region31: #{gnn_forward.1} parent=11 // pred_region
        _
      $region32: #{gnn_forward.1} parent=11 // pred_fallthru
        _
    $region12: #{gnn_forward.1} parent=5 // pred_fallthru
      _
    %p228 = scmp.lt.s32.totalorder %s12, 2
    // Predicated region
    $region33: #{gnn_forward.1} parent=5 // pred_check
      %p229 = pneg %p228
    $region34: #{gnn_forward.1} parent=5 // pred_check_branch
      %231 = sbr.rel (%p229) target = $region36
    $region35: #{gnn_forward.1} parent=5 // pred_region
      // Predicated region
      $region37: #{gnn_forward.1} parent=35 // pred_check
        %p232 = pneg %p95
      $region38: #{gnn_forward.1} parent=35 // pred_check_branch
        %234 = sbr.rel (%p232) target = $region40
      $region39: #{gnn_forward.1} parent=35 // pred_region
        %s235 = ssub.s32 1, %s19
        %s236 = smul.u32 %s20, %s235
        %s237 = smul.u32 16, %s236
        %p238 = scmp.lt.s32.totalorder %s237, 15
        %s239 = scalar_select %p238, %s237, 15
        %s240 = smul.addr %s239, 8
        %s241 = scalar_lea.vmem %s2, %s240
        %s242 = ssub.s32 1, %s19
        %s243 = smul.u32 %s20, %s242
        %s244 = smul.u32 16, %s243
      $region40: #{gnn_forward.1} parent=35 // pred_fallthru
        _
    $region36: #{gnn_forward.1} parent=5 // pred_fallthru
      _
    %p245 = scmp.le.s32.totalorder 1, %s12
    %p246 = scmp.lt.s32.totalorder %s12, 3
    %p247 = pnand %p245, %p246
    %p248 = pneg %p247
    // Predicated region
    $region41: #{gnn_forward.1} parent=5 // pred_check
      _
    $region42: #{gnn_forward.1} parent=5 // pred_check_branch
      %250 = sbr.rel (%p247) target = $region44
    $region43: #{gnn_forward.1} parent=5 // pred_region
      %s251 = ssub.s32 %s12, 1
      %s252 = smul.u32 16, %s22
      %p253 = scmp.lt.s32.totalorder %s252, 15
      %s254 = scalar_select %p253, %s252, 15
      %s255 = smul.addr %s254, 2
      %s256 = scalar_lea.vmem %s0, %s255
      %p257 = pneg %p50
      %p258 = pneg %p47
      %p259 = pneg %p71
      %p260 = pneg %p68
      %s261 = ssub.s32 1, %s21
      %s262 = smul.u32 %s22, %s261
      %s263 = smul.u32 16, %s262
      %p264 = scmp.lt.s32.totalorder %s263, 15
      %s265 = scalar_select %p264, %s263, 15
      %s266 = smul.addr %s265, 8
      %s267 = scalar_lea.vmem %s2, %s266
      %p268 = pneg %p101
      %p269 = pneg %p98
      %p270 = pneg %p122
      %p271 = pneg %p119
      %p272 = pneg %p143
      %p273 = pneg %p140
      %p274 = pneg %p164
      %p275 = pneg %p161
      %p276 = pneg %p192
      %p277 = pneg %p189
      %s278 = smul.u32 %s22, %s21
      %s279 = smul.u32 16, %s278
      %p280 = scmp.lt.s32.totalorder %s279, 15
      %s281 = scalar_select %p280, %s279, 15
      %s282 = smul.addr %s281, 8
      %s283 = scalar_lea.vmem %s6, %s282
      %s284 = smul.u32 16, %s22
      %p285 = scmp.lt.s32.totalorder %s284, 15
      %s286 = scalar_select %p285, %s284, 15
      %s287 = smul.addr %s286, 2
      %s288 = scalar_lea.vmem %s0, %s287
      %s289 = smul.u32 16, %s22
      %s290 = ssub.s32 1, %s21
      %s291 = smul.u32 %s22, %s290
      %s292 = smul.u32 16, %s291
      %p293 = scmp.lt.s32.totalorder %s292, 15
      %s294 = scalar_select %p293, %s292, 15
      %s295 = smul.addr %s294, 8
      %s296 = scalar_lea.vmem %s2, %s295
      %s297 = ssub.s32 1, %s21
      %s298 = smul.u32 %s22, %s297
      %s299 = smul.u32 16, %s298
      %s300 = smul.u32 %s22, %s21
      %s301 = smul.u32 16, %s300
      %p302 = scmp.lt.s32.totalorder %s301, 15
      %s303 = scalar_select %p302, %s301, 15
      %s304 = smul.addr %s303, 8
      %s305 = scalar_lea.vmem %s6, %s304
      %s306 = smul.u32 %s22, %s21
      %s307 = smul.u32 16, %s306
      %s309 = smul.u32 %s22, 128
      %v310 = vld [vmem:[%s288] sm:$0x3]
      %v311 = vld [vmem:[%s288 + $0x2] sm:$0x3]
      %v312 = vld [vmem:[%s288 + $0x4] sm:$0x3]
      %v313 = vld [vmem:[%s288 + $0x6] sm:$0x3]
      %v314 = vld [vmem:[%s288 + $0x8] sm:$0x3]
      %v315 = vld [vmem:[%s288 + $0xa] sm:$0x3]
      %v316 = vld [vmem:[%s288 + $0xc] sm:$0x3]
      %v317 = vld [vmem:[%s288 + $0xe] sm:$0x3]
      %v318 = vld [vmem:[%s288 + $0x10] sm:$0x3]
      %v319 = vld [vmem:[%s288 + $0x12] sm:$0x3]
      %v320 = vld [vmem:[%s288 + $0x14] sm:$0x3]
      %v321 = vld [vmem:[%s288 + $0x16] sm:$0x3]
      %v322 = vld [vmem:[%s288 + $0x18] sm:$0x3]
      %v323 = vld [vmem:[%s288 + $0x1a] sm:$0x3]
      %v324 = vld [vmem:[%s288 + $0x1c] sm:$0x3]
      %v325 = vld [vmem:[%s288 + $0x1e] sm:$0x3]
      %v326 = vunpack.c.l.s8.bf16 %v310
      %v327 = vunpack.c.l.s8.bf16 %v311
      %v328 = vunpack.c.l.s8.bf16 %v312
      %v329 = vunpack.c.l.s8.bf16 %v313
      %v330 = vunpack.c.l.s8.bf16 %v314
      %v331 = vunpack.c.l.s8.bf16 %v315
      %v332 = vunpack.c.l.s8.bf16 %v316
      %v333 = vunpack.c.l.s8.bf16 %v317
      %v334 = vunpack.c.l.s8.bf16 %v318
      %v335 = vunpack.c.l.s8.bf16 %v319
      %v336 = vunpack.c.l.s8.bf16 %v320
      %v337 = vunpack.c.l.s8.bf16 %v321
      %v338 = vunpack.c.l.s8.bf16 %v322
      %v339 = vunpack.c.l.s8.bf16 %v323
      %v340 = vunpack.c.l.s8.bf16 %v324
      %v341 = vunpack.c.l.s8.bf16 %v325
      %p342 = scmp.eq.s32.totalorder %s21, 0
      // Predicated region
      $region45: #{gnn_forward.1} parent=43 // pred_check
        %p343 = pneg %p342
      $region46: #{gnn_forward.1} parent=43 // pred_check_branch
        %345 = sbr.rel (%p343) target = $region48
      $region47: #{gnn_forward.1} parent=43 // pred_region
        %v346 = vld [vmem:[%s1] sm:$0xf]
        %v347 = vld [vmem:[%s1 + $0x4] sm:$0xf]
        %v348 = vld [vmem:[%s1 + $0x8] sm:$0xf]
        %v349 = vld [vmem:[%s1 + $0xc] sm:$0xf]
        %v350 = vld [vmem:[%s1 + $0x10] sm:$0xf]
        %v351 = vld [vmem:[%s1 + $0x14] sm:$0xf]
        %v352 = vld [vmem:[%s1 + $0x18] sm:$0xf]
        %v353 = vld [vmem:[%s1 + $0x1c] sm:$0xf]
        %v354 = vld [vmem:[%s1 + $0x20] sm:$0xf]
        %v355 = vld [vmem:[%s1 + $0x24] sm:$0xf]
        %v356 = vld [vmem:[%s1 + $0x28] sm:$0xf]
        %v357 = vld [vmem:[%s1 + $0x2c] sm:$0xf]
        %v358 = vld [vmem:[%s1 + $0x30] sm:$0xf]
        %v359 = vld [vmem:[%s1 + $0x34] sm:$0xf]
        %v360 = vld [vmem:[%s1 + $0x38] sm:$0xf]
        %v361 = vld [vmem:[%s1 + $0x3c] sm:$0xf]
        %v362 = vld [vmem:[%s296] sm:$0xff]
        %v363 = vld [vmem:[%s296 + $0x8] sm:$0xff]
        %v364 = vld [vmem:[%s296 + $0x10] sm:$0xff]
        %v365 = vld [vmem:[%s296 + $0x18] sm:$0xff]
        %v366 = vld [vmem:[%s296 + $0x20] sm:$0xff]
        %v367 = vld [vmem:[%s296 + $0x28] sm:$0xff]
        %v368 = vld [vmem:[%s296 + $0x30] sm:$0xff]
        %v369 = vld [vmem:[%s296 + $0x38] sm:$0xff]
        %v370 = vld [vmem:[%s296 + $0x40] sm:$0xff]
        %v371 = vld [vmem:[%s296 + $0x48] sm:$0xff]
        %v372 = vld [vmem:[%s296 + $0x50] sm:$0xff]
        %v373 = vld [vmem:[%s296 + $0x58] sm:$0xff]
        %v374 = vld [vmem:[%s296 + $0x60] sm:$0xff]
        %v375 = vld [vmem:[%s296 + $0x68] sm:$0xff]
        %v376 = vld [vmem:[%s296 + $0x70] sm:$0xff]
        %v377 = vld [vmem:[%s296 + $0x78] sm:$0xff]
        %v394 = vunpack.c.l.b16 %v326
        %v395 = vunpack.c.l.b16 %v327
        %v396 = vunpack.c.l.b16 %v328
        %v397 = vunpack.c.l.b16 %v329
        %v398 = vunpack.c.l.b16 %v330
        %v399 = vunpack.c.l.b16 %v331
        %v400 = vunpack.c.l.b16 %v332
        %v401 = vunpack.c.l.b16 %v333
        %v402 = vunpack.c.l.b16 %v334
        %v403 = vunpack.c.l.b16 %v335
        %v404 = vunpack.c.l.b16 %v336
        %v405 = vunpack.c.l.b16 %v337
        %v406 = vunpack.c.l.b16 %v338
        %v407 = vunpack.c.l.b16 %v339
        %v408 = vunpack.c.l.b16 %v340
        %v409 = vunpack.c.l.b16 %v341
        %v410 = vpack.c.b16 %v395, %v394
        %v411 = vpack.c.b16 %v397, %v396
        %v412 = vpack.c.b16 %v399, %v398
        %v413 = vpack.c.b16 %v401, %v400
        %v414 = vpack.c.b16 %v403, %v402
        %v415 = vpack.c.b16 %v405, %v404
        %v416 = vpack.c.b16 %v407, %v406
        %v417 = vpack.c.b16 %v409, %v408
        %v442 = vunpack.c.l.b16 %v346
        %v443 = vunpack.c.l.b16 %v347
        %v444 = vunpack.c.l.b16 %v348
        %v445 = vunpack.c.l.b16 %v349
        %v446 = vunpack.c.l.b16 %v350
        %v447 = vunpack.c.l.b16 %v351
        %v448 = vunpack.c.l.b16 %v352
        %v449 = vunpack.c.l.b16 %v353
        %v450 = vunpack.c.l.b16 %v354
        %v451 = vunpack.c.l.b16 %v355
        %v452 = vunpack.c.l.b16 %v356
        %v453 = vunpack.c.l.b16 %v357
        %v454 = vunpack.c.l.b16 %v358
        %v455 = vunpack.c.l.b16 %v359
        %v456 = vunpack.c.l.b16 %v360
        %v457 = vunpack.c.l.b16 %v361
        %v458 = vpack.c.b16 %v443, %v442
        %v459 = vpack.c.b16 %v445, %v444
        %v460 = vpack.c.b16 %v447, %v446
        %v461 = vpack.c.b16 %v449, %v448
        %v462 = vpack.c.b16 %v451, %v450
        %v463 = vpack.c.b16 %v453, %v452
        %v464 = vpack.c.b16 %v455, %v454
        %v465 = vpack.c.b16 %v457, %v456
        %474 = vmatprep.subr.bf16.mxu0 0
        %475 = vmatpush1.bf16.msra.mxu0 %v465
        %476 = vmatprep.subr.bf16.mxu0 0
        %477 = vmatpush1.bf16.msra.mxu0 %v464
        %478 = vmatprep.subr.bf16.mxu0 0
        %479 = vmatpush1.bf16.msra.mxu0 %v463
        %480 = vmatprep.subr.bf16.mxu0 0
        %481 = vmatpush1.bf16.msra.mxu0 %v462
        %482 = vmatprep.subr.bf16.mxu0 0
        %483 = vmatpush1.bf16.msra.mxu0 %v461
        %484 = vmatprep.subr.bf16.mxu0 0
        %485 = vmatpush1.bf16.msra.mxu0 %v460
        %486 = vmatprep.subr.bf16.mxu0 0
        %487 = vmatpush1.bf16.msra.mxu0 %v459
        %488 = vmatprep.subr.bf16.mxu0 0
        %489 = vmatpush1.bf16.msra.mxu0 %v458
        %490 = vmatprep.subr.bf16.mxu0 0
        %491 = vmatpush2.bf16.msra.mxu0 0
        %492 = vmatprep.subr.bf16.mxu0 0
        %493 = vmatpush2.bf16.msra.mxu0 0
        %494 = vmatprep.subr.bf16.mxu0 0
        %495 = vmatpush2.bf16.msra.mxu0 0
        %496 = vmatprep.subr.bf16.mxu0 0
        %497 = vmatpush2.bf16.msra.mxu0 0
        %498 = vmatprep.subr.bf16.mxu0 0
        %499 = vmatpush2.bf16.msra.mxu0 0
        %500 = vmatprep.subr.bf16.mxu0 0
        %501 = vmatpush2.bf16.msra.mxu0 0
        %502 = vmatprep.subr.bf16.mxu0 0
        %503 = vmatpush2.bf16.msra.mxu0 0
        %504 = vmatprep.subr.bf16.mxu0 0
        %505 = vmatpush2.bf16.msra.mxu0 0
        %506 = vmatprep.mubr.bf16.mxu0 0
        %507 = vmatmul.mubr.bf16.gmra.mxu0 %v410
        %v508 = vpop.f32.mrf.mxu0
        %v509 = vadd.f32 %v362, %v508
        %v510 = vpop.f32.mrf.mxu0
        %v511 = vpop.f32.mrf.mxu0
        %v512 = vadd.f32 %v363, %v511
        %v513 = vpop.f32.mrf.mxu0
        %514 = vmatprep.mubr.bf16.mxu0 0
        %515 = vmatmul.mubr.bf16.gmra.mxu0 %v411
        %v516 = vpop.f32.mrf.mxu0
        %v517 = vadd.f32 %v364, %v516
        %v518 = vpop.f32.mrf.mxu0
        %v519 = vpop.f32.mrf.mxu0
        %v520 = vadd.f32 %v365, %v519
        %v521 = vpop.f32.mrf.mxu0
        %522 = vmatprep.mubr.bf16.mxu0 0
        %523 = vmatmul.mubr.bf16.gmra.mxu0 %v412
        %v524 = vpop.f32.mrf.mxu0
        %v525 = vadd.f32 %v366, %v524
        %v526 = vpop.f32.mrf.mxu0
        %v527 = vpop.f32.mrf.mxu0
        %v528 = vadd.f32 %v367, %v527
        %v529 = vpop.f32.mrf.mxu0
        %530 = vmatprep.mubr.bf16.mxu0 0
        %531 = vmatmul.mubr.bf16.gmra.mxu0 %v413
        %v532 = vpop.f32.mrf.mxu0
        %v533 = vadd.f32 %v368, %v532
        %v534 = vpop.f32.mrf.mxu0
        %v535 = vpop.f32.mrf.mxu0
        %v536 = vadd.f32 %v369, %v535
        %v537 = vpop.f32.mrf.mxu0
        %538 = vmatprep.mubr.bf16.mxu0 0
        %539 = vmatmul.mubr.bf16.gmra.mxu0 %v414
        %v540 = vpop.f32.mrf.mxu0
        %v541 = vadd.f32 %v370, %v540
        %v542 = vpop.f32.mrf.mxu0
        %v543 = vpop.f32.mrf.mxu0
        %v544 = vadd.f32 %v371, %v543
        %v545 = vpop.f32.mrf.mxu0
        %546 = vmatprep.mubr.bf16.mxu0 0
        %547 = vmatmul.mubr.bf16.gmra.mxu0 %v415
        %v548 = vpop.f32.mrf.mxu0
        %v549 = vadd.f32 %v372, %v548
        %v550 = vpop.f32.mrf.mxu0
        %v551 = vpop.f32.mrf.mxu0
        %v552 = vadd.f32 %v373, %v551
        %v553 = vpop.f32.mrf.mxu0
        %554 = vmatprep.mubr.bf16.mxu0 0
        %555 = vmatmul.mubr.bf16.gmra.mxu0 %v416
        %v556 = vpop.f32.mrf.mxu0
        %v557 = vadd.f32 %v374, %v556
        %v558 = vpop.f32.mrf.mxu0
        %v559 = vpop.f32.mrf.mxu0
        %v560 = vadd.f32 %v375, %v559
        %v561 = vpop.f32.mrf.mxu0
        %562 = vmatprep.mubr.bf16.mxu0 0
        %563 = vmatmul.mubr.bf16.gmra.mxu0 %v417
        %v564 = vpop.f32.mrf.mxu0
        %v565 = vadd.f32 %v376, %v564
        %v566 = vpop.f32.mrf.mxu0
        %v567 = vpop.f32.mrf.mxu0
        %v568 = vadd.f32 %v377, %v567
        %v569 = vpop.f32.mrf.mxu0
        %570 = vdwg.mxu0
        %v571 = vpack.c.bf16 %v512, %v509
        %v572 = vpack.c.bf16 %v520, %v517
        %v573 = vpack.c.bf16 %v528, %v525
        %v574 = vpack.c.bf16 %v536, %v533
        %v575 = vpack.c.bf16 %v544, %v541
        %v576 = vpack.c.bf16 %v552, %v549
        %v577 = vpack.c.bf16 %v560, %v557
        %v578 = vpack.c.bf16 %v568, %v565
        %v587 = vunpack.c.l.b16 %v571
        %v588 = vunpack.c.h.b16 %v571
        %v589 = vunpack.c.l.b16 %v572
        %v590 = vunpack.c.h.b16 %v572
        %v591 = vunpack.c.l.b16 %v573
        %v592 = vunpack.c.h.b16 %v573
        %v593 = vunpack.c.l.b16 %v574
        %v594 = vunpack.c.h.b16 %v574
        %v595 = vunpack.c.l.b16 %v575
        %v596 = vunpack.c.h.b16 %v575
        %v597 = vunpack.c.l.b16 %v576
        %v598 = vunpack.c.h.b16 %v576
        %v599 = vunpack.c.l.b16 %v577
        %v600 = vunpack.c.h.b16 %v577
        %v601 = vunpack.c.l.b16 %v578
        %v602 = vunpack.c.h.b16 %v578
        %v603 = vpack.c.b16 %v587, %v587
        %v604 = vpack.c.b16 %v588, %v588
        %v605 = vpack.c.b16 %v589, %v589
        %v606 = vpack.c.b16 %v590, %v590
        %v607 = vpack.c.b16 %v591, %v591
        %v608 = vpack.c.b16 %v592, %v592
        %v609 = vpack.c.b16 %v593, %v593
        %v610 = vpack.c.b16 %v594, %v594
        %v611 = vpack.c.b16 %v595, %v595
        %v612 = vpack.c.b16 %v596, %v596
        %v613 = vpack.c.b16 %v597, %v597
        %v614 = vpack.c.b16 %v598, %v598
        %v615 = vpack.c.b16 %v599, %v599
        %v616 = vpack.c.b16 %v600, %v600
        %v617 = vpack.c.b16 %v601, %v601
        %v618 = vpack.c.b16 %v602, %v602
        %s635 = sshra.s32 %s309, 3
        %s636 = sand.u32 %s309, 7
        %s637 = smul.addr %s635, 4
        %s638 = scalar_lea.vmem [#allocation2], %s637
        %639 = vst [vmem:[%s638] sm:$0xf] %v603
        %640 = vst [vmem:[%s638 + $0x4] sm:$0xf] %v604
        %641 = vst [vmem:[%s638 + $0x8] sm:$0xf] %v605
        %642 = vst [vmem:[%s638 + $0xc] sm:$0xf] %v606
        %643 = vst [vmem:[%s638 + $0x10] sm:$0xf] %v607
        %644 = vst [vmem:[%s638 + $0x14] sm:$0xf] %v608
        %645 = vst [vmem:[%s638 + $0x18] sm:$0xf] %v609
        %646 = vst [vmem:[%s638 + $0x1c] sm:$0xf] %v610
        %647 = vst [vmem:[%s638 + $0x20] sm:$0xf] %v611
        %648 = vst [vmem:[%s638 + $0x24] sm:$0xf] %v612
        %649 = vst [vmem:[%s638 + $0x28] sm:$0xf] %v613
        %650 = vst [vmem:[%s638 + $0x2c] sm:$0xf] %v614
        %651 = vst [vmem:[%s638 + $0x30] sm:$0xf] %v615
        %652 = vst [vmem:[%s638 + $0x34] sm:$0xf] %v616
        %653 = vst [vmem:[%s638 + $0x38] sm:$0xf] %v617
        %654 = vst [vmem:[%s638 + $0x3c] sm:$0xf] %v618
        %p655 = scmp.eq.s32.totalorder %s22, 0
        // Predicated region
        $region49: #{gnn_forward.1} parent=47 // pred_check
          %p656 = pneg %p655
        $region50: #{gnn_forward.1} parent=47 // pred_check_branch
          %658 = sbr.rel (%p656) target = $region52
        $region51: #{gnn_forward.1} parent=47 // pred_region
          %659 = vst [vmem:[%s305] sm:$0xff] 0.0
          %660 = vst [vmem:[%s305 + $0x8] sm:$0xff] 0.0
          %661 = vst [vmem:[%s305 + $0x10] sm:$0xff] 0.0
          %662 = vst [vmem:[%s305 + $0x18] sm:$0xff] 0.0
          %663 = vst [vmem:[%s305 + $0x20] sm:$0xff] 0.0
          %664 = vst [vmem:[%s305 + $0x28] sm:$0xff] 0.0
          %665 = vst [vmem:[%s305 + $0x30] sm:$0xff] 0.0
          %666 = vst [vmem:[%s305 + $0x38] sm:$0xff] 0.0
          %667 = vst [vmem:[%s305 + $0x40] sm:$0xff] 0.0
          %668 = vst [vmem:[%s305 + $0x48] sm:$0xff] 0.0
          %669 = vst [vmem:[%s305 + $0x50] sm:$0xff] 0.0
          %670 = vst [vmem:[%s305 + $0x58] sm:$0xff] 0.0
          %671 = vst [vmem:[%s305 + $0x60] sm:$0xff] 0.0
          %672 = vst [vmem:[%s305 + $0x68] sm:$0xff] 0.0
          %673 = vst [vmem:[%s305 + $0x70] sm:$0xff] 0.0
          %674 = vst [vmem:[%s305 + $0x78] sm:$0xff] 0.0
        $region52: #{gnn_forward.1} parent=47 // pred_fallthru
          _
      $region48: #{gnn_forward.1} parent=43 // pred_fallthru
        _
      %p675 = scmp.eq.s32.totalorder %s21, 1
      // Predicated region
      $region53: #{gnn_forward.1} parent=43 // pred_check
        %p676 = pneg %p675
      $region54: #{gnn_forward.1} parent=43 // pred_check_branch
        %678 = sbr.rel (%p676) target = $region56
      $region55: #{gnn_forward.1} parent=43 // pred_region
        %v679 = vld [vmem:[#allocation2] sm:$0xf]
        %v680 = vld [vmem:[#allocation2 + $0x4] sm:$0xf]
        %v681 = vld [vmem:[#allocation2 + $0x8] sm:$0xf]
        %v682 = vld [vmem:[#allocation2 + $0xc] sm:$0xf]
        %v683 = vld [vmem:[#allocation2 + $0x10] sm:$0xf]
        %v684 = vld [vmem:[#allocation2 + $0x14] sm:$0xf]
        %v685 = vld [vmem:[#allocation2 + $0x18] sm:$0xf]
        %v686 = vld [vmem:[#allocation2 + $0x1c] sm:$0xf]
        %v687 = vld [vmem:[#allocation2 + $0x20] sm:$0xf]
        %v688 = vld [vmem:[#allocation2 + $0x24] sm:$0xf]
        %v689 = vld [vmem:[#allocation2 + $0x28] sm:$0xf]
        %v690 = vld [vmem:[#allocation2 + $0x2c] sm:$0xf]
        %v691 = vld [vmem:[#allocation2 + $0x30] sm:$0xf]
        %v692 = vld [vmem:[#allocation2 + $0x34] sm:$0xf]
        %v693 = vld [vmem:[#allocation2 + $0x38] sm:$0xf]
        %v694 = vld [vmem:[#allocation2 + $0x3c] sm:$0xf]
        %v711 = vunpack.c.l.b16 %v326
        %v712 = vunpack.c.l.b16 %v327
        %v713 = vunpack.c.l.b16 %v328
        %v714 = vunpack.c.l.b16 %v329
        %v715 = vunpack.c.l.b16 %v330
        %v716 = vunpack.c.l.b16 %v331
        %v717 = vunpack.c.l.b16 %v332
        %v718 = vunpack.c.l.b16 %v333
        %v719 = vunpack.c.l.b16 %v334
        %v720 = vunpack.c.l.b16 %v335
        %v721 = vunpack.c.l.b16 %v336
        %v722 = vunpack.c.l.b16 %v337
        %v723 = vunpack.c.l.b16 %v338
        %v724 = vunpack.c.l.b16 %v339
        %v725 = vunpack.c.l.b16 %v340
        %v726 = vunpack.c.l.b16 %v341
        %v727 = vpack.c.b16 %v712, %v711
        %v728 = vpack.c.b16 %v714, %v713
        %v729 = vpack.c.b16 %v716, %v715
        %v730 = vpack.c.b16 %v718, %v717
        %v731 = vpack.c.b16 %v720, %v719
        %v732 = vpack.c.b16 %v722, %v721
        %v733 = vpack.c.b16 %v724, %v723
        %v734 = vpack.c.b16 %v726, %v725
        %v759 = vunpack.c.l.b16 %v679
        %v760 = vunpack.c.l.b16 %v680
        %v761 = vunpack.c.l.b16 %v681
        %v762 = vunpack.c.l.b16 %v682
        %v763 = vunpack.c.l.b16 %v683
        %v764 = vunpack.c.l.b16 %v684
        %v765 = vunpack.c.l.b16 %v685
        %v766 = vunpack.c.l.b16 %v686
        %v767 = vunpack.c.l.b16 %v687
        %v768 = vunpack.c.l.b16 %v688
        %v769 = vunpack.c.l.b16 %v689
        %v770 = vunpack.c.l.b16 %v690
        %v771 = vunpack.c.l.b16 %v691
        %v772 = vunpack.c.l.b16 %v692
        %v773 = vunpack.c.l.b16 %v693
        %v774 = vunpack.c.l.b16 %v694
        %v775 = vpack.c.b16 %v760, %v759
        %v776 = vpack.c.b16 %v762, %v761
        %v777 = vpack.c.b16 %v764, %v763
        %v778 = vpack.c.b16 %v766, %v765
        %v779 = vpack.c.b16 %v768, %v767
        %v780 = vpack.c.b16 %v770, %v769
        %v781 = vpack.c.b16 %v772, %v771
        %v782 = vpack.c.b16 %v774, %v773
        %791 = vmatprep.subr.bf16.mxu0 0
        %792 = vmatpush1.bf16.msra.mxu0 %v782
        %793 = vmatprep.subr.bf16.mxu0 0
        %794 = vmatpush1.bf16.msra.mxu0 %v781
        %795 = vmatprep.subr.bf16.mxu0 0
        %796 = vmatpush1.bf16.msra.mxu0 %v780
        %797 = vmatprep.subr.bf16.mxu0 0
        %798 = vmatpush1.bf16.msra.mxu0 %v779
        %799 = vmatprep.subr.bf16.mxu0 0
        %800 = vmatpush1.bf16.msra.mxu0 %v778
        %801 = vmatprep.subr.bf16.mxu0 0
        %802 = vmatpush1.bf16.msra.mxu0 %v777
        %803 = vmatprep.subr.bf16.mxu0 0
        %804 = vmatpush1.bf16.msra.mxu0 %v776
        %805 = vmatprep.subr.bf16.mxu0 0
        %806 = vmatpush1.bf16.msra.mxu0 %v775
        %807 = vmatprep.subr.bf16.mxu0 0
        %808 = vmatpush2.bf16.msra.mxu0 0
        %809 = vmatprep.subr.bf16.mxu0 0
        %810 = vmatpush2.bf16.msra.mxu0 0
        %811 = vmatprep.subr.bf16.mxu0 0
        %812 = vmatpush2.bf16.msra.mxu0 0
        %813 = vmatprep.subr.bf16.mxu0 0
        %814 = vmatpush2.bf16.msra.mxu0 0
        %815 = vmatprep.subr.bf16.mxu0 0
        %816 = vmatpush2.bf16.msra.mxu0 0
        %817 = vmatprep.subr.bf16.mxu0 0
        %818 = vmatpush2.bf16.msra.mxu0 0
        %819 = vmatprep.subr.bf16.mxu0 0
        %820 = vmatpush2.bf16.msra.mxu0 0
        %821 = vmatprep.subr.bf16.mxu0 0
        %822 = vmatpush2.bf16.msra.mxu0 0
        %823 = vmatprep.mubr.bf16.mxu0 0
        %824 = vmatmul.mubr.bf16.gmra.mxu0 %v727
        %v825 = vpop.f32.mrf.mxu0
        %v826 = vadd.f32 0.0, %v825
        %v827 = vpop.f32.mrf.mxu0
        %v828 = vpop.f32.mrf.mxu0
        %v829 = vadd.f32 0.0, %v828
        %v830 = vpop.f32.mrf.mxu0
        %831 = vmatprep.mubr.bf16.mxu0 0
        %832 = vmatmul.mubr.bf16.gmra.mxu0 %v728
        %v833 = vpop.f32.mrf.mxu0
        %v834 = vadd.f32 0.0, %v833
        %v835 = vpop.f32.mrf.mxu0
        %v836 = vpop.f32.mrf.mxu0
        %v837 = vadd.f32 0.0, %v836
        %v838 = vpop.f32.mrf.mxu0
        %839 = vmatprep.mubr.bf16.mxu0 0
        %840 = vmatmul.mubr.bf16.gmra.mxu0 %v729
        %v841 = vpop.f32.mrf.mxu0
        %v842 = vadd.f32 0.0, %v841
        %v843 = vpop.f32.mrf.mxu0
        %v844 = vpop.f32.mrf.mxu0
        %v845 = vadd.f32 0.0, %v844
        %v846 = vpop.f32.mrf.mxu0
        %847 = vmatprep.mubr.bf16.mxu0 0
        %848 = vmatmul.mubr.bf16.gmra.mxu0 %v730
        %v849 = vpop.f32.mrf.mxu0
        %v850 = vadd.f32 0.0, %v849
        %v851 = vpop.f32.mrf.mxu0
        %v852 = vpop.f32.mrf.mxu0
        %v853 = vadd.f32 0.0, %v852
        %v854 = vpop.f32.mrf.mxu0
        %855 = vmatprep.mubr.bf16.mxu0 0
        %856 = vmatmul.mubr.bf16.gmra.mxu0 %v731
        %v857 = vpop.f32.mrf.mxu0
        %v858 = vadd.f32 0.0, %v857
        %v859 = vpop.f32.mrf.mxu0
        %v860 = vpop.f32.mrf.mxu0
        %v861 = vadd.f32 0.0, %v860
        %v862 = vpop.f32.mrf.mxu0
        %863 = vmatprep.mubr.bf16.mxu0 0
        %864 = vmatmul.mubr.bf16.gmra.mxu0 %v732
        %v865 = vpop.f32.mrf.mxu0
        %v866 = vadd.f32 0.0, %v865
        %v867 = vpop.f32.mrf.mxu0
        %v868 = vpop.f32.mrf.mxu0
        %v869 = vadd.f32 0.0, %v868
        %v870 = vpop.f32.mrf.mxu0
        %871 = vmatprep.mubr.bf16.mxu0 0
        %872 = vmatmul.mubr.bf16.gmra.mxu0 %v733
        %v873 = vpop.f32.mrf.mxu0
        %v874 = vadd.f32 0.0, %v873
        %v875 = vpop.f32.mrf.mxu0
        %v876 = vpop.f32.mrf.mxu0
        %v877 = vadd.f32 0.0, %v876
        %v878 = vpop.f32.mrf.mxu0
        %879 = vmatprep.mubr.bf16.mxu0 0
        %880 = vmatmul.mubr.bf16.gmra.mxu0 %v734
        %v881 = vpop.f32.mrf.mxu0
        %v882 = vadd.f32 0.0, %v881
        %v883 = vpop.f32.mrf.mxu0
        %v884 = vpop.f32.mrf.mxu0
        %v885 = vadd.f32 0.0, %v884
        %v886 = vpop.f32.mrf.mxu0
        %887 = vdwg.mxu0
        %s888 = sshra.s32 %s309, 3
        %s889 = sand.u32 %s309, 7
        %s890 = smul.addr %s888, 4
        %s891 = scalar_lea.vmem [#allocation2], %s890
        %v892 = vld [vmem:[%s891] sm:$0xf]
        %v893 = vld [vmem:[%s891 + $0x4] sm:$0xf]
        %v894 = vld [vmem:[%s891 + $0x8] sm:$0xf]
        %v895 = vld [vmem:[%s891 + $0xc] sm:$0xf]
        %v896 = vld [vmem:[%s891 + $0x10] sm:$0xf]
        %v897 = vld [vmem:[%s891 + $0x14] sm:$0xf]
        %v898 = vld [vmem:[%s891 + $0x18] sm:$0xf]
        %v899 = vld [vmem:[%s891 + $0x1c] sm:$0xf]
        %v900 = vld [vmem:[%s891 + $0x20] sm:$0xf]
        %v901 = vld [vmem:[%s891 + $0x24] sm:$0xf]
        %v902 = vld [vmem:[%s891 + $0x28] sm:$0xf]
        %v903 = vld [vmem:[%s891 + $0x2c] sm:$0xf]
        %v904 = vld [vmem:[%s891 + $0x30] sm:$0xf]
        %v905 = vld [vmem:[%s891 + $0x34] sm:$0xf]
        %v906 = vld [vmem:[%s891 + $0x38] sm:$0xf]
        %v907 = vld [vmem:[%s891 + $0x3c] sm:$0xf]
        %v908 = vpack.c.bf16 %v829, %v826
        %v909 = vpack.c.bf16 %v837, %v834
        %v910 = vpack.c.bf16 %v845, %v842
        %v911 = vpack.c.bf16 %v853, %v850
        %v912 = vpack.c.bf16 %v861, %v858
        %v913 = vpack.c.bf16 %v869, %v866
        %v914 = vpack.c.bf16 %v877, %v874
        %v915 = vpack.c.bf16 %v885, %v882
        %v916 = vld [vmem:[%s3] sm:$0xf]
        %v917 = vld [vmem:[%s3 + $0x4] sm:$0xf]
        %v918 = vld [vmem:[%s3 + $0x8] sm:$0xf]
        %v919 = vld [vmem:[%s3 + $0xc] sm:$0xf]
        %v920 = vld [vmem:[%s3 + $0x10] sm:$0xf]
        %v921 = vld [vmem:[%s3 + $0x14] sm:$0xf]
        %v922 = vld [vmem:[%s3 + $0x18] sm:$0xf]
        %v923 = vld [vmem:[%s3 + $0x1c] sm:$0xf]
        %v924 = vld [vmem:[%s3 + $0x20] sm:$0xf]
        %v925 = vld [vmem:[%s3 + $0x24] sm:$0xf]
        %v926 = vld [vmem:[%s3 + $0x28] sm:$0xf]
        %v927 = vld [vmem:[%s3 + $0x2c] sm:$0xf]
        %v928 = vld [vmem:[%s3 + $0x30] sm:$0xf]
        %v929 = vld [vmem:[%s3 + $0x34] sm:$0xf]
        %v930 = vld [vmem:[%s3 + $0x38] sm:$0xf]
        %v931 = vld [vmem:[%s3 + $0x3c] sm:$0xf]
        %v932 = vld [vmem:[%s4] sm:$0xf]
        %v933 = vld [vmem:[%s4 + $0x4] sm:$0xf]
        %v934 = vld [vmem:[%s4 + $0x8] sm:$0xf]
        %v935 = vld [vmem:[%s4 + $0xc] sm:$0xf]
        %v936 = vld [vmem:[%s4 + $0x10] sm:$0xf]
        %v937 = vld [vmem:[%s4 + $0x14] sm:$0xf]
        %v938 = vld [vmem:[%s4 + $0x18] sm:$0xf]
        %v939 = vld [vmem:[%s4 + $0x1c] sm:$0xf]
        %v940 = vld [vmem:[%s4 + $0x20] sm:$0xf]
        %v941 = vld [vmem:[%s4 + $0x24] sm:$0xf]
        %v942 = vld [vmem:[%s4 + $0x28] sm:$0xf]
        %v943 = vld [vmem:[%s4 + $0x2c] sm:$0xf]
        %v944 = vld [vmem:[%s4 + $0x30] sm:$0xf]
        %v945 = vld [vmem:[%s4 + $0x34] sm:$0xf]
        %v946 = vld [vmem:[%s4 + $0x38] sm:$0xf]
        %v947 = vld [vmem:[%s4 + $0x3c] sm:$0xf]
        %v964 = vunpack.c.l.b16 %v892
        %v965 = vunpack.c.l.b16 %v893
        %v966 = vunpack.c.l.b16 %v894
        %v967 = vunpack.c.l.b16 %v895
        %v968 = vunpack.c.l.b16 %v896
        %v969 = vunpack.c.l.b16 %v897
        %v970 = vunpack.c.l.b16 %v898
        %v971 = vunpack.c.l.b16 %v899
        %v972 = vunpack.c.l.b16 %v900
        %v973 = vunpack.c.l.b16 %v901
        %v974 = vunpack.c.l.b16 %v902
        %v975 = vunpack.c.l.b16 %v903
        %v976 = vunpack.c.l.b16 %v904
        %v977 = vunpack.c.l.b16 %v905
        %v978 = vunpack.c.l.b16 %v906
        %v979 = vunpack.c.l.b16 %v907
        %v980 = vpack.c.b16 %v965, %v964
        %v981 = vpack.c.b16 %v967, %v966
        %v982 = vpack.c.b16 %v969, %v968
        %v983 = vpack.c.b16 %v971, %v970
        %v984 = vpack.c.b16 %v973, %v972
        %v985 = vpack.c.b16 %v975, %v974
        %v986 = vpack.c.b16 %v977, %v976
        %v987 = vpack.c.b16 %v979, %v978
        %v1012 = vunpack.c.l.b16 %v932
        %v1013 = vunpack.c.l.b16 %v933
        %v1014 = vunpack.c.l.b16 %v934
        %v1015 = vunpack.c.l.b16 %v935
        %v1016 = vunpack.c.l.b16 %v936
        %v1017 = vunpack.c.l.b16 %v937
        %v1018 = vunpack.c.l.b16 %v938
        %v1019 = vunpack.c.l.b16 %v939
        %v1020 = vunpack.c.l.b16 %v940
        %v1021 = vunpack.c.l.b16 %v941
        %v1022 = vunpack.c.l.b16 %v942
        %v1023 = vunpack.c.l.b16 %v943
        %v1024 = vunpack.c.l.b16 %v944
        %v1025 = vunpack.c.l.b16 %v945
        %v1026 = vunpack.c.l.b16 %v946
        %v1027 = vunpack.c.l.b16 %v947
        %v1028 = vpack.c.b16 %v1013, %v1012
        %v1029 = vpack.c.b16 %v1015, %v1014
        %v1030 = vpack.c.b16 %v1017, %v1016
        %v1031 = vpack.c.b16 %v1019, %v1018
        %v1032 = vpack.c.b16 %v1021, %v1020
        %v1033 = vpack.c.b16 %v1023, %v1022
        %v1034 = vpack.c.b16 %v1025, %v1024
        %v1035 = vpack.c.b16 %v1027, %v1026
        %1044 = vmatprep.subr.bf16.mxu0 0
        %1045 = vmatpush1.bf16.msra.mxu0 %v1035
        %1046 = vmatprep.subr.bf16.mxu0 0
        %1047 = vmatpush1.bf16.msra.mxu0 %v1034
        %1048 = vmatprep.subr.bf16.mxu0 0
        %1049 = vmatpush1.bf16.msra.mxu0 %v1033
        %1050 = vmatprep.subr.bf16.mxu0 0
        %1051 = vmatpush1.bf16.msra.mxu0 %v1032
        %1052 = vmatprep.subr.bf16.mxu0 0
        %1053 = vmatpush1.bf16.msra.mxu0 %v1031
        %1054 = vmatprep.subr.bf16.mxu0 0
        %1055 = vmatpush1.bf16.msra.mxu0 %v1030
        %1056 = vmatprep.subr.bf16.mxu0 0
        %1057 = vmatpush1.bf16.msra.mxu0 %v1029
        %1058 = vmatprep.subr.bf16.mxu0 0
        %1059 = vmatpush1.bf16.msra.mxu0 %v1028
        %1060 = vmatprep.subr.bf16.mxu0 0
        %1061 = vmatpush2.bf16.msra.mxu0 0
        %1062 = vmatprep.subr.bf16.mxu0 0
        %1063 = vmatpush2.bf16.msra.mxu0 0
        %1064 = vmatprep.subr.bf16.mxu0 0
        %1065 = vmatpush2.bf16.msra.mxu0 0
        %1066 = vmatprep.subr.bf16.mxu0 0
        %1067 = vmatpush2.bf16.msra.mxu0 0
        %1068 = vmatprep.subr.bf16.mxu0 0
        %1069 = vmatpush2.bf16.msra.mxu0 0
        %1070 = vmatprep.subr.bf16.mxu0 0
        %1071 = vmatpush2.bf16.msra.mxu0 0
        %1072 = vmatprep.subr.bf16.mxu0 0
        %1073 = vmatpush2.bf16.msra.mxu0 0
        %1074 = vmatprep.subr.bf16.mxu0 0
        %1075 = vmatpush2.bf16.msra.mxu0 0
        %1076 = vmatprep.mubr.bf16.mxu0 0
        %1077 = vmatmul.mubr.bf16.gmra.mxu0 %v980
        %v1078 = vpop.f32.mrf.mxu0
        %v1079 = vadd.f32 0.0, %v1078
        %v1080 = vpop.f32.mrf.mxu0
        %v1081 = vpop.f32.mrf.mxu0
        %v1082 = vadd.f32 0.0, %v1081
        %v1083 = vpop.f32.mrf.mxu0
        %1084 = vmatprep.mubr.bf16.mxu0 0
        %1085 = vmatmul.mubr.bf16.gmra.mxu0 %v981
        %v1086 = vpop.f32.mrf.mxu0
        %v1087 = vadd.f32 0.0, %v1086
        %v1088 = vpop.f32.mrf.mxu0
        %v1089 = vpop.f32.mrf.mxu0
        %v1090 = vadd.f32 0.0, %v1089
        %v1091 = vpop.f32.mrf.mxu0
        %1092 = vmatprep.mubr.bf16.mxu0 0
        %1093 = vmatmul.mubr.bf16.gmra.mxu0 %v982
        %v1094 = vpop.f32.mrf.mxu0
        %v1095 = vadd.f32 0.0, %v1094
        %v1096 = vpop.f32.mrf.mxu0
        %v1097 = vpop.f32.mrf.mxu0
        %v1098 = vadd.f32 0.0, %v1097
        %v1099 = vpop.f32.mrf.mxu0
        %1100 = vmatprep.mubr.bf16.mxu0 0
        %1101 = vmatmul.mubr.bf16.gmra.mxu0 %v983
        %v1102 = vpop.f32.mrf.mxu0
        %v1103 = vadd.f32 0.0, %v1102
        %v1104 = vpop.f32.mrf.mxu0
        %v1105 = vpop.f32.mrf.mxu0
        %v1106 = vadd.f32 0.0, %v1105
        %v1107 = vpop.f32.mrf.mxu0
        %1108 = vmatprep.mubr.bf16.mxu0 0
        %1109 = vmatmul.mubr.bf16.gmra.mxu0 %v984
        %v1110 = vpop.f32.mrf.mxu0
        %v1111 = vadd.f32 0.0, %v1110
        %v1112 = vpop.f32.mrf.mxu0
        %v1113 = vpop.f32.mrf.mxu0
        %v1114 = vadd.f32 0.0, %v1113
        %v1115 = vpop.f32.mrf.mxu0
        %1116 = vmatprep.mubr.bf16.mxu0 0
        %1117 = vmatmul.mubr.bf16.gmra.mxu0 %v985
        %v1118 = vpop.f32.mrf.mxu0
        %v1119 = vadd.f32 0.0, %v1118
        %v1120 = vpop.f32.mrf.mxu0
        %v1121 = vpop.f32.mrf.mxu0
        %v1122 = vadd.f32 0.0, %v1121
        %v1123 = vpop.f32.mrf.mxu0
        %1124 = vmatprep.mubr.bf16.mxu0 0
        %1125 = vmatmul.mubr.bf16.gmra.mxu0 %v986
        %v1126 = vpop.f32.mrf.mxu0
        %v1127 = vadd.f32 0.0, %v1126
        %v1128 = vpop.f32.mrf.mxu0
        %v1129 = vpop.f32.mrf.mxu0
        %v1130 = vadd.f32 0.0, %v1129
        %v1131 = vpop.f32.mrf.mxu0
        %1132 = vmatprep.mubr.bf16.mxu0 0
        %1133 = vmatmul.mubr.bf16.gmra.mxu0 %v987
        %v1134 = vpop.f32.mrf.mxu0
        %v1135 = vadd.f32 0.0, %v1134
        %v1136 = vpop.f32.mrf.mxu0
        %v1137 = vpop.f32.mrf.mxu0
        %v1138 = vadd.f32 0.0, %v1137
        %v1139 = vpop.f32.mrf.mxu0
        %1140 = vdwg.mxu0
        %v1157 = vunpack.c.l.b16 %v916
        %v1158 = vunpack.c.l.b16 %v917
        %v1159 = vunpack.c.l.b16 %v918
        %v1160 = vunpack.c.l.b16 %v919
        %v1161 = vunpack.c.l.b16 %v920
        %v1162 = vunpack.c.l.b16 %v921
        %v1163 = vunpack.c.l.b16 %v922
        %v1164 = vunpack.c.l.b16 %v923
        %v1165 = vunpack.c.l.b16 %v924
        %v1166 = vunpack.c.l.b16 %v925
        %v1167 = vunpack.c.l.b16 %v926
        %v1168 = vunpack.c.l.b16 %v927
        %v1169 = vunpack.c.l.b16 %v928
        %v1170 = vunpack.c.l.b16 %v929
        %v1171 = vunpack.c.l.b16 %v930
        %v1172 = vunpack.c.l.b16 %v931
        %v1173 = vpack.c.b16 %v1158, %v1157
        %v1174 = vpack.c.b16 %v1160, %v1159
        %v1175 = vpack.c.b16 %v1162, %v1161
        %v1176 = vpack.c.b16 %v1164, %v1163
        %v1177 = vpack.c.b16 %v1166, %v1165
        %v1178 = vpack.c.b16 %v1168, %v1167
        %v1179 = vpack.c.b16 %v1170, %v1169
        %v1180 = vpack.c.b16 %v1172, %v1171
        %1189 = vmatprep.subr.bf16.mxu0 0
        %1190 = vmatpush1.bf16.msra.mxu0 %v1180
        %1191 = vmatprep.subr.bf16.mxu0 0
        %1192 = vmatpush1.bf16.msra.mxu0 %v1179
        %1193 = vmatprep.subr.bf16.mxu0 0
        %1194 = vmatpush1.bf16.msra.mxu0 %v1178
        %1195 = vmatprep.subr.bf16.mxu0 0
        %1196 = vmatpush1.bf16.msra.mxu0 %v1177
        %1197 = vmatprep.subr.bf16.mxu0 0
        %1198 = vmatpush1.bf16.msra.mxu0 %v1176
        %1199 = vmatprep.subr.bf16.mxu0 0
        %1200 = vmatpush1.bf16.msra.mxu0 %v1175
        %1201 = vmatprep.subr.bf16.mxu0 0
        %1202 = vmatpush1.bf16.msra.mxu0 %v1174
        %1203 = vmatprep.subr.bf16.mxu0 0
        %1204 = vmatpush1.bf16.msra.mxu0 %v1173
        %1205 = vmatprep.subr.bf16.mxu0 0
        %1206 = vmatpush2.bf16.msra.mxu0 0
        %1207 = vmatprep.subr.bf16.mxu0 0
        %1208 = vmatpush2.bf16.msra.mxu0 0
        %1209 = vmatprep.subr.bf16.mxu0 0
        %1210 = vmatpush2.bf16.msra.mxu0 0
        %1211 = vmatprep.subr.bf16.mxu0 0
        %1212 = vmatpush2.bf16.msra.mxu0 0
        %1213 = vmatprep.subr.bf16.mxu0 0
        %1214 = vmatpush2.bf16.msra.mxu0 0
        %1215 = vmatprep.subr.bf16.mxu0 0
        %1216 = vmatpush2.bf16.msra.mxu0 0
        %1217 = vmatprep.subr.bf16.mxu0 0
        %1218 = vmatpush2.bf16.msra.mxu0 0
        %1219 = vmatprep.subr.bf16.mxu0 0
        %1220 = vmatpush2.bf16.msra.mxu0 0
        %1221 = vmatprep.mubr.bf16.mxu0 0
        %1222 = vmatmul.mubr.bf16.gmra.mxu0 %v908
        %v1223 = vpop.f32.mrf.mxu0
        %v1224 = vadd.f32 %v1079, %v1223
        %v1225 = vpop.f32.mrf.mxu0
        %v1226 = vpop.f32.mrf.mxu0
        %v1227 = vadd.f32 %v1082, %v1226
        %v1228 = vpop.f32.mrf.mxu0
        %1229 = vmatprep.mubr.bf16.mxu0 0
        %1230 = vmatmul.mubr.bf16.gmra.mxu0 %v909
        %v1231 = vpop.f32.mrf.mxu0
        %v1232 = vadd.f32 %v1087, %v1231
        %v1233 = vpop.f32.mrf.mxu0
        %v1234 = vpop.f32.mrf.mxu0
        %v1235 = vadd.f32 %v1090, %v1234
        %v1236 = vpop.f32.mrf.mxu0
        %1237 = vmatprep.mubr.bf16.mxu0 0
        %1238 = vmatmul.mubr.bf16.gmra.mxu0 %v910
        %v1239 = vpop.f32.mrf.mxu0
        %v1240 = vadd.f32 %v1095, %v1239
        %v1241 = vpop.f32.mrf.mxu0
        %v1242 = vpop.f32.mrf.mxu0
        %v1243 = vadd.f32 %v1098, %v1242
        %v1244 = vpop.f32.mrf.mxu0
        %1245 = vmatprep.mubr.bf16.mxu0 0
        %1246 = vmatmul.mubr.bf16.gmra.mxu0 %v911
        %v1247 = vpop.f32.mrf.mxu0
        %v1248 = vadd.f32 %v1103, %v1247
        %v1249 = vpop.f32.mrf.mxu0
        %v1250 = vpop.f32.mrf.mxu0
        %v1251 = vadd.f32 %v1106, %v1250
        %v1252 = vpop.f32.mrf.mxu0
        %1253 = vmatprep.mubr.bf16.mxu0 0
        %1254 = vmatmul.mubr.bf16.gmra.mxu0 %v912
        %v1255 = vpop.f32.mrf.mxu0
        %v1256 = vadd.f32 %v1111, %v1255
        %v1257 = vpop.f32.mrf.mxu0
        %v1258 = vpop.f32.mrf.mxu0
        %v1259 = vadd.f32 %v1114, %v1258
        %v1260 = vpop.f32.mrf.mxu0
        %1261 = vmatprep.mubr.bf16.mxu0 0
        %1262 = vmatmul.mubr.bf16.gmra.mxu0 %v913
        %v1263 = vpop.f32.mrf.mxu0
        %v1264 = vadd.f32 %v1119, %v1263
        %v1265 = vpop.f32.mrf.mxu0
        %v1266 = vpop.f32.mrf.mxu0
        %v1267 = vadd.f32 %v1122, %v1266
        %v1268 = vpop.f32.mrf.mxu0
        %1269 = vmatprep.mubr.bf16.mxu0 0
        %1270 = vmatmul.mubr.bf16.gmra.mxu0 %v914
        %v1271 = vpop.f32.mrf.mxu0
        %v1272 = vadd.f32 %v1127, %v1271
        %v1273 = vpop.f32.mrf.mxu0
        %v1274 = vpop.f32.mrf.mxu0
        %v1275 = vadd.f32 %v1130, %v1274
        %v1276 = vpop.f32.mrf.mxu0
        %1277 = vmatprep.mubr.bf16.mxu0 0
        %1278 = vmatmul.mubr.bf16.gmra.mxu0 %v915
        %v1279 = vpop.f32.mrf.mxu0
        %v1280 = vadd.f32 %v1135, %v1279
        %v1281 = vpop.f32.mrf.mxu0
        %v1282 = vpop.f32.mrf.mxu0
        %v1283 = vadd.f32 %v1138, %v1282
        %v1284 = vpop.f32.mrf.mxu0
        %1285 = vdwg.mxu0
        %v1286 = vld [vmem:[%s5] sm:$0x1]
        %v1288 = vlaneseq
        %v1289 = vshrl.u32 %v1288, 7
        %v1290 = vsub.s32 0, %v1289
        %v1291 = vrot.slane %v1286, %v1290
        %v1293 = vadd.f32 %v1224, %v1291
        %v1294 = vadd.f32 %v1227, %v1291
        %v1295 = vadd.f32 %v1232, %v1291
        %v1296 = vadd.f32 %v1235, %v1291
        %v1297 = vadd.f32 %v1240, %v1291
        %v1298 = vadd.f32 %v1243, %v1291
        %v1299 = vadd.f32 %v1248, %v1291
        %v1300 = vadd.f32 %v1251, %v1291
        %v1301 = vadd.f32 %v1256, %v1291
        %v1302 = vadd.f32 %v1259, %v1291
        %v1303 = vadd.f32 %v1264, %v1291
        %v1304 = vadd.f32 %v1267, %v1291
        %v1305 = vadd.f32 %v1272, %v1291
        %v1306 = vadd.f32 %v1275, %v1291
        %v1307 = vadd.f32 %v1280, %v1291
        %v1308 = vadd.f32 %v1283, %v1291
        %1309 = vst [vmem:[%s305] sm:$0xff] %v1293
        %1310 = vst [vmem:[%s305 + $0x8] sm:$0xff] %v1294
        %1311 = vst [vmem:[%s305 + $0x10] sm:$0xff] %v1295
        %1312 = vst [vmem:[%s305 + $0x18] sm:$0xff] %v1296
        %1313 = vst [vmem:[%s305 + $0x20] sm:$0xff] %v1297
        %1314 = vst [vmem:[%s305 + $0x28] sm:$0xff] %v1298
        %1315 = vst [vmem:[%s305 + $0x30] sm:$0xff] %v1299
        %1316 = vst [vmem:[%s305 + $0x38] sm:$0xff] %v1300
        %1317 = vst [vmem:[%s305 + $0x40] sm:$0xff] %v1301
        %1318 = vst [vmem:[%s305 + $0x48] sm:$0xff] %v1302
        %1319 = vst [vmem:[%s305 + $0x50] sm:$0xff] %v1303
        %1320 = vst [vmem:[%s305 + $0x58] sm:$0xff] %v1304
        %1321 = vst [vmem:[%s305 + $0x60] sm:$0xff] %v1305
        %1322 = vst [vmem:[%s305 + $0x68] sm:$0xff] %v1306
        %1323 = vst [vmem:[%s305 + $0x70] sm:$0xff] %v1307
        %1324 = vst [vmem:[%s305 + $0x78] sm:$0xff] %v1308
      $region56: #{gnn_forward.1} parent=43 // pred_fallthru
        _
      %s1325 = smul.u32 %s22, %s21
      %s1326 = smul.u32 16, %s1325
      %p1327 = scmp.lt.s32.totalorder %s1326, 15
      %s1328 = scalar_select %p1327, %s1326, 15
      %s1329 = smul.addr %s1328, 8
      %s1330 = scalar_lea.vmem %s6, %s1329
      // Predicated region
      $region57: #{gnn_forward.1} parent=43 // pred_check
        %p1331 = pneg %p189
      $region58: #{gnn_forward.1} parent=43 // pred_check_branch
        %1333 = sbr.rel (%p1331) target = $region60
      $region59: #{gnn_forward.1} parent=43 // pred_region
        %s1334 = smul.u32 %s22, %s21
        %s1335 = smul.u32 16, %s1334
      $region60: #{gnn_forward.1} parent=43 // pred_fallthru
        _
    $region44: #{gnn_forward.1} parent=5 // pred_fallthru
      _
    %p1336 = scmp.le.s32.totalorder 2, %s12
    // Predicated region
    $region61: #{gnn_forward.1} parent=5 // pred_check
      %p1337 = pneg %p1336
    $region62: #{gnn_forward.1} parent=5 // pred_check_branch
      %1339 = sbr.rel (%p1337) target = $region64
    $region63: #{gnn_forward.1} parent=5 // pred_region
      %s1340 = ssub.s32 %s12, 2
      // Predicated region
      $region65: #{gnn_forward.1} parent=63 // pred_check
        %p1341 = pneg %p195
      $region66: #{gnn_forward.1} parent=63 // pred_check_branch
        %1343 = sbr.rel (%p1341) target = $region68
      $region67: #{gnn_forward.1} parent=63 // pred_region
        %s1344 = smul.u32 %s24, %s23
        %s1345 = smul.u32 16, %s1344
        %p1346 = scmp.lt.s32.totalorder %s1345, 15
        %s1347 = scalar_select %p1346, %s1345, 15
        %s1348 = smul.addr %s1347, 8
        %s1349 = scalar_lea.vmem %s6, %s1348
      $region68: #{gnn_forward.1} parent=63 // pred_fallthru
        _
    $region64: #{gnn_forward.1} parent=5 // pred_fallthru
      _
  $region6: #{gnn_forward.1} parent=0 // loop_footer
    %s16 = sadd.s32 1, %s12
  $region7: #{gnn_forward.1} parent=0 // loop_footer_branch
    %11 = sbr.rel target = $region3
  $region8: #{gnn_forward.1} parent=0 // loop_exit
    _

</llo_original>
